<compile_context>
chip_gen: v7x
topology: tpu7x:2x2x1
jax: 0.10.0
libtpu: 0.0.40
codegen_flags: <defaults>
</compile_context>

<pallas_src>
import functools
import math

import jax
import jax.numpy as jnp
from jax.experimental import pallas as pl
from jax.experimental.pallas import tpu as pltpu


# ---------------------------------------------------------------------------
# bool-output capability probe (used once; falls back to uint8 + convert)
# ---------------------------------------------------------------------------
_BOOL_OUT_SUPPORTED = None


def _bool_out_supported():
    """True iff this Mosaic build can store jnp.bool_ kernel outputs correctly."""
    global _BOOL_OUT_SUPPORTED
    if _BOOL_OUT_SUPPORTED is None:
        def probe(x_ref, o_ref):
            o_ref[...] = x_ref[...] > 0.0

        try:
            x = jnp.where((jnp.arange(20 * 160) % 3) == 0, -1.0, 1.0)
            x = x.reshape(20, 160).astype(jnp.float32)
            # Exercises full blocks, a ragged last block and a non-128 lane width,
            # i.e. the same store shapes the real kernels produce.
            y = pl.pallas_call(
                probe,
                out_shape=jax.ShapeDtypeStruct((20, 160), jnp.bool_),
                grid=(3,),
                in_specs=[pl.BlockSpec((8, 160), lambda i: (i, 0))],
                out_specs=pl.BlockSpec((8, 160), lambda i: (i, 0)),
            )(x)
            _BOOL_OUT_SUPPORTED = bool(jnp.array_equal(y, x > 0.0))
        except Exception:
            _BOOL_OUT_SUPPORTED = False
    return _BOOL_OUT_SUPPORTED


# ---------------------------------------------------------------------------
# Kernels
# ---------------------------------------------------------------------------
def _bnd_flat_kernel(col_ref, x_ref, o_ref, *, W):
    """Small-width images, one flattened image per block row (lane-dense stores).

    col_ref: (1, HW) int32, col_ref[0, f] = f % W (precomputed -> works for any W).
    x_ref:   (TB, HW) f32 images flattened row-major.
    o_ref:   (TB, HW) bool / uint8.
    """
    x = x_ref[...]
    hw = x.shape[1]
    col = col_ref[...]                                          # (1, HW)
    flat = jax.lax.broadcasted_iota(jnp.int32, (1, hw), 1)      # flattened position

    # Zero-padded neighbours of every pixel (one XLU roll each, masked at borders).
    x_up = jnp.where(flat < W, 0.0, pltpu.roll(x, shift=W, axis=1))             # img[y-1, x]
    x_down = jnp.where(flat >= hw - W, 0.0, pltpu.roll(x, shift=hw - W, axis=1))  # img[y+1, x]
    x_left = jnp.where(col == 0, 0.0, pltpu.roll(x, shift=1, axis=1))             # img[y, x-1]
    x_right = jnp.where(col == W - 1, 0.0, pltpu.roll(x, shift=hw - 1, axis=1))   # img[y, x+1]

    # sqrt(h^2 + v^2) > 0  <=>  (up != down) | (left != right)   (exact f64 semantics)
    o_ref[...] = ((x_up != x_down) | (x_left != x_right)).astype(o_ref.dtype)


def _bnd_rows_kernel(rowmod_ref, x_ref, o_ref, *, H):
    """Wide images viewed as stacked rows: x is the (N*H, W) view of the batch.

    rowmod_ref: (R, 1) int32, row index within its image (global_row % H).
    x_ref:      (R, W) f32, R = TB*H rows covering whole images.
    o_ref:      (R, W) bool / uint8.
    Fully vectorized over the whole block (no per-image Python unroll).
    """
    x = x_ref[...]
    r, w = x.shape
    rowmod = rowmod_ref[...]                                    # (R, 1)
    colid = jax.lax.broadcasted_iota(jnp.int32, (1, w), 1)      # (1, W)

    x_up = jnp.where(rowmod == 0, 0.0, pltpu.roll(x, shift=1, axis=0))
    x_down = jnp.where(rowmod == H - 1, 0.0, pltpu.roll(x, shift=r - 1, axis=0))
    x_left = jnp.where(colid == 0, 0.0, pltpu.roll(x, shift=1, axis=1))
    x_right = jnp.where(colid == w - 1, 0.0, pltpu.roll(x, shift=w - 1, axis=1))

    o_ref[...] = ((x_up != x_down) | (x_left != x_right)).astype(o_ref.dtype)


def _bnd_image_kernel(x_ref, o_ref):
    """Fallback for large single images: one whole (H, W) image per grid step."""
    x = x_ref[0]
    H, W = x.shape
    row = jax.lax.broadcasted_iota(jnp.int32, (H, W), 0)
    col = jax.lax.broadcasted_iota(jnp.int32, (H, W), 1)

    x_up = jnp.where(row == 0, 0.0, pltpu.roll(x, shift=1, axis=0))
    x_down = jnp.where(row == H - 1, 0.0, pltpu.roll(x, shift=H - 1, axis=0))
    x_left = jnp.where(col == 0, 0.0, pltpu.roll(x, shift=1, axis=1))
    x_right = jnp.where(col == W - 1, 0.0, pltpu.roll(x, shift=W - 1, axis=1))

    o_ref[0] = ((x_up != x_down) | (x_left != x_right)).astype(o_ref.dtype)


# ---------------------------------------------------------------------------
# Tiling decisions
# ---------------------------------------------------------------------------
_TARGET_BLOCK_BYTES = 1 << 20       # ~1 MiB of f32 input per grid step (pipeline sweet spot)
_FLAT_ROW_MAX_BYTES = 128 << 10     # flat path: one flattened image per block row


def _flat_rows_per_block(n, row_bytes):
    rows = max(1, _TARGET_BLOCK_BYTES // row_bytes)
    if n > 8:
        rows = min(rows, pl.cdiv(n, 2))      # >=2 grid steps -> both v7x TCs get work
    if rows >= n:
        return n                              # one full-dim block (allowed by (8,128) rule)
    return max(8, (rows // 8) * 8)            # tiled: keep the sublane dim 8-aligned


def _stacked_images_per_block(n, H, img_bytes):
    # granularity so a block always covers whole images and R = tb*H is 8-aligned
    g = 8 // math.gcd(H, 8)
    tb = max(1, _TARGET_BLOCK_BYTES // img_bytes)
    if n > 1:
        tb = min(tb, pl.cdiv(n, 2))           # >=2 grid steps for the megacore
    tb = max(g, (tb // g) * g)
    if tb >= n:
        return n                               # one block spanning the full batch
    return tb


# ---------------------------------------------------------------------------
# Forward
# ---------------------------------------------------------------------------
def bnd_forward(img):
    """img: (N, H, W) float -> (N, 1, H, W) bool edge map (matches BND.forward)."""
    img = img.astype(jnp.float32)
    N, H, W = img.shape
    HW = H * W
    img_bytes = HW * 4
    out_dtype = jnp.bool_ if _bool_out_supported() else jnp.uint8
    g = 8 // math.gcd(H, 8)

    # Lane-dense flat path: each flattened image is one (1, HW) row, so stores are
    # unmasked even though W < 128.  HW % 128 == 0 is kept (rolls along the flattened
    # lane axis stay 128-aligned); power-of-two W is no longer required.
    # TODO(synk): small-W shapes with HW % 128 != 0 fall to the stacked path below
    # (masked stores); pad HW to a 128 multiple in the wrapper if they become common.
    if W < 128 and HW % 128 == 0 and img_bytes <= _FLAT_ROW_MAX_BYTES:
        tb = _flat_rows_per_block(N, img_bytes)
        col = (jnp.arange(HW, dtype=jnp.int32) % W).reshape(1, HW)
        mask = pl.pallas_call(
            functools.partial(_bnd_flat_kernel, W=W),
            out_shape=jax.ShapeDtypeStruct((N, HW), out_dtype),
            grid=(pl.cdiv(N, tb),),
            in_specs=[pl.BlockSpec((1, HW), lambda i: (0, 0)),
                      pl.BlockSpec((tb, HW), lambda i: (i, 0))],
            out_specs=pl.BlockSpec((tb, HW), lambda i: (i, 0)),
            compiler_params=pltpu.CompilerParams(
                dimension_semantics=("parallel",)),
        )(col, img.reshape(N, HW))
        mask = mask.reshape(N, H, W)

    elif g * img_bytes <= 4 * _TARGET_BLOCK_BYTES:
        # Stacked-rows path: view the batch as (N*H, W) so the kernel stays 2-D and
        # fully vectorized across several images per grid step (no static unroll).
        tb = _stacked_images_per_block(N, H, img_bytes)
        R = tb * H
        rowmod = (jnp.arange(N * H, dtype=jnp.int32) % H).reshape(N * H, 1)
        mask = pl.pallas_call(
            functools.partial(_bnd_rows_kernel, H=H),
            out_shape=jax.ShapeDtypeStruct((N * H, W), out_dtype),
            grid=(pl.cdiv(N, tb),),
            in_specs=[pl.BlockSpec((R, 1), lambda i: (i, 0)),
                      pl.BlockSpec((R, W), lambda i: (i, 0))],
            out_specs=pl.BlockSpec((R, W), lambda i: (i, 0)),
            compiler_params=pltpu.CompilerParams(
                dimension_semantics=("parallel",)),
        )(rowmod, img.reshape(N * H, W))
        mask = mask.reshape(N, H, W)

    else:
        # Very large single images: one whole image per grid step, scoped VMEM raised.
        # TODO(synk): H-tile with a 1-row halo so multi-MP images stay in the
        # 0.5-2 MiB block sweet spot and fit v7x's 64 MiB / v5e's 16 MiB scoped VMEM.
        params = dict(dimension_semantics=("parallel",))
        need = int(2.5 * img_bytes) + (4 << 20)   # double-buffered in + out + slack
        if need > (24 << 20):
            params["vmem_limit_bytes"] = min(need, 64 << 20)
        mask = pl.pallas_call(
            _bnd_image_kernel,
            out_shape=jax.ShapeDtypeStruct((N, H, W), out_dtype),
            grid=(N,),
            in_specs=[pl.BlockSpec((1, H, W), lambda i: (i, 0, 0))],
            out_specs=pl.BlockSpec((1, H, W), lambda i: (i, 0, 0)),
            compiler_params=pltpu.CompilerParams(**params),
        )(img)

    if mask.dtype != jnp.bool_:
        # Only taken when bool kernel outputs are unavailable in this Mosaic build.
        mask = mask.astype(jnp.bool_)
    return mask[:, None, :, :]


# ---------------------------------------------------------------------------
# Pure-JAX reference (same math as the f64 PyTorch module)
# ---------------------------------------------------------------------------
def _bnd_reference(img):
    x = img.astype(jnp.float32)
    xp = jnp.pad(x, ((0, 0), (1, 1), (1, 1)))
    edge_h = xp[:, 0:-2, 1:-1] - xp[:, 2:, 1:-1]   # img[y-1,x] - img[y+1,x]
    edge_v = xp[:, 1:-1, 0:-2] - xp[:, 1:-1, 2:]   # img[y,x-1] - img[y,x+1]
    return (jnp.sqrt(edge_h ** 2 + edge_v ** 2) > 0)[:, None, :, :]


if __name__ == "__main__":
    key = jax.random.PRNGKey(0)
    keys = jax.random.split(key, 5)

    def rand_img(k, shape):
        # small integer-valued floats: plenty of exactly-equal neighbours, so the
        # `> 0` threshold is non-trivial and the f64 reference is reproduced exactly.
        return jax.random.randint(k, shape, -2, 3).astype(jnp.float32)

    cases = [
        rand_img(keys[0], (2, 16, 16)),    # flat path, pow-2 W, single block
        rand_img(keys[1], (5, 16, 24)),    # flat path, non-pow-2 W (col side input)
        rand_img(keys[2], (20, 16, 16)),   # flat path, N-tiled grid with ragged tail
        rand_img(keys[3], (2, 8, 128)),    # stacked-rows path, 2 parallel grid steps
        rand_img(keys[4], (3, 16, 128)),   # stacked-rows path, ragged last block
    ]

    for x in cases:
        edge = jax.block_until_ready(bnd_forward(x))
        assert edge.shape == (x.shape[0], 1, x.shape[1], x.shape[2])
        assert edge.dtype == jnp.bool_
        assert bool(jnp.all(edge == _bnd_reference(x))), f"mismatch for shape {x.shape}"

    print("KERNEL_OK")
</pallas_src>

<mosaic_0001>
module attributes {stable_mosaic.version = 11 : i64} {
  func.func @probe(%arg0: i32, %arg1: memref<8x160xf32, #tpu.memory_space<vmem>>, %arg2: memref<8x160xi32, #tpu.memory_space<vmem>>) attributes {dimension_semantics = [#tpu.dimension_semantics<arbitrary>], iteration_bounds = array<i64: 3>, scalar_prefetch = 0 : i64, scratch_operands = 0 : i64, tpu.core_type = #tpu.core_type<tc>, window_params = [{transform_indices = @transform_0, window_bounds = array<i64: 8, 160>}, {transform_indices = @transform_1, window_bounds = array<i64: 8, 160>}]} {
    %c0 = arith.constant 0 : index
    %c0_0 = arith.constant 0 : index
    %0 = vector.load %arg1[%c0, %c0_0] : memref<8x160xf32, #tpu.memory_space<vmem>>, vector<8x160xf32>
    %cst = arith.constant 0.000000e+00 : f32
    %1 = vector.broadcast %cst : f32 to vector<8x160xf32>
    %2 = arith.cmpf ogt, %0, %1 : vector<8x160xf32>
    %c0_1 = arith.constant 0 : index
    %c0_2 = arith.constant 0 : index
    %3 = vector.load %arg2[%c0_1, %c0_2] : memref<8x160xi32, #tpu.memory_space<vmem>>, vector<8x160xi32>
    %4 = arith.extui %2 : vector<8x160xi1> to vector<8x160xi32>
    %cst_3 = arith.constant dense<0> : vector<8x160xi32>
    %5 = arith.cmpi ne, %3, %cst_3 : vector<8x160xi32>
    tpu.vector_store %arg2[%c0_1, %c0_2], %4 {strides = array<i32>} : memref<8x160xi32, #tpu.memory_space<vmem>>, vector<8x160xi32>,
    return
  }
  func.func @transform_0(%arg0: i32) -> (i32, i32) {
    %c0_i32 = arith.constant 0 : i32
    %c0_i32_0 = arith.constant 0 : i32
    return %arg0, %c0_i32 : i32, i32
  }
  func.func @transform_1(%arg0: i32) -> (i32, i32) {
    %c0_i32 = arith.constant 0 : i32
    %c0_i32_0 = arith.constant 0 : i32
    return %arg0, %c0_i32 : i32, i32
  }
}

module attributes {stable_mosaic.version = 11 : i64} {
  func.func @_bnd_flat_kernel(%arg0: i32, %arg1: memref<1x256xi32, #tpu.memory_space<vmem>>, %arg2: memref<2x256xf32, #tpu.memory_space<vmem>>, %arg3: memref<2x256xi8, #tpu.memory_space<vmem>>) attributes {dimension_semantics = [#tpu.dimension_semantics<parallel>], iteration_bounds = array<i64: 1>, scalar_prefetch = 0 : i64, scratch_operands = 0 : i64, tpu.core_type = #tpu.core_type<tc>, window_params = [{pipeline_mode = #tpu.pipeline_mode<synchronous>, transform_indices = @transform_0, window_bounds = array<i64: 1, 256>}, {transform_indices = @transform_1, window_bounds = array<i64: 2, 256>}, {transform_indices = @transform_2, window_bounds = array<i64: 2, 256>}]} {
    %c0 = arith.constant 0 : index
    %c0_0 = arith.constant 0 : index
    %0 = vector.load %arg2[%c0, %c0_0] : memref<2x256xf32, #tpu.memory_space<vmem>>, vector<2x256xf32>
    %c0_1 = arith.constant 0 : index
    %c0_2 = arith.constant 0 : index
    %1 = vector.load %arg1[%c0_1, %c0_2] : memref<1x256xi32, #tpu.memory_space<vmem>>, vector<1x256xi32>
    %2 = tpu.iota {dimensions = array<i32: 1>} : vector<1x256xi32>
    %c16_i32 = arith.constant 16 : i32
    %3 = vector.broadcast %c16_i32 : i32 to vector<1x256xi32>
    %4 = arith.cmpi slt, %2, %3 : vector<1x256xi32>
    %c16_i32_3 = arith.constant 16 : i32
    %5 = tpu.dynamic_rotate %0 by %c16_i32_3 dim 1 : vector<2x256xf32>, i32 -> vector<2x256xf32>
    %cst = arith.constant 0.000000e+00 : f32
    %6 = vector.shape_cast %4 : vector<1x256xi1> to vector<1x256xi1>
    %7 = vector.broadcast %6 : vector<1x256xi1> to vector<2x256xi1>
    %8 = vector.broadcast %cst : f32 to vector<2x256xf32>
    %9 = arith.select %7, %8, %5 : vector<2x256xi1>, vector<2x256xf32>
    %c240_i32 = arith.constant 240 : i32
    %10 = vector.broadcast %c240_i32 : i32 to vector<1x256xi32>
    %11 = arith.cmpi sge, %2, %10 : vector<1x256xi32>
    %c240_i32_4 = arith.constant 240 : i32
    %12 = tpu.dynamic_rotate %0 by %c240_i32_4 dim 1 : vector<2x256xf32>, i32 -> vector<2x256xf32>
    %cst_5 = arith.constant 0.000000e+00 : f32
    %13 = vector.shape_cast %11 : vector<1x256xi1> to vector<1x256xi1>
    %14 = vector.broadcast %13 : vector<1x256xi1> to vector<2x256xi1>
    %15 = vector.broadcast %cst_5 : f32 to vector<2x256xf32>
    %16 = arith.select %14, %15, %12 : vector<2x256xi1>, vector<2x256xf32>
    %c0_i32 = arith.constant 0 : i32
    %17 = vector.broadcast %c0_i32 : i32 to vector<1x256xi32>
    %18 = arith.cmpi eq, %1, %17 : vector<1x256xi32>
    %c1_i32 = arith.constant 1 : i32
    %19 = tpu.dynamic_rotate %0 by %c1_i32 dim 1 : vector<2x256xf32>, i32 -> vector<2x256xf32>
    %cst_6 = arith.constant 0.000000e+00 : f32
    %20 = vector.shape_cast %18 : vector<1x256xi1> to vector<1x256xi1>
    %21 = vector.broadcast %20 : vector<1x256xi1> to vector<2x256xi1>
    %22 = vector.broadcast %cst_6 : f32 to vector<2x256xf32>
    %23 = arith.select %21, %22, %19 : vector<2x256xi1>, vector<2x256xf32>
    %c15_i32 = arith.constant 15 : i32
    %24 = vector.broadcast %c15_i32 : i32 to vector<1x256xi32>
    %25 = arith.cmpi eq, %1, %24 : vector<1x256xi32>
    %c255_i32 = arith.constant 255 : i32
    %26 = tpu.dynamic_rotate %0 by %c255_i32 dim 1 : vector<2x256xf32>, i32 -> vector<2x256xf32>
    %cst_7 = arith.constant 0.000000e+00 : f32
    %27 = vector.shape_cast %25 : vector<1x256xi1> to vector<1x256xi1>
    %28 = vector.broadcast %27 : vector<1x256xi1> to vector<2x256xi1>
    %29 = vector.broadcast %cst_7 : f32 to vector<2x256xf32>
    %30 = arith.select %28, %29, %26 : vector<2x256xi1>, vector<2x256xf32>
    %31 = arith.cmpf one, %9, %16 : vector<2x256xf32>
    %32 = arith.cmpf one, %23, %30 : vector<2x256xf32>
    %33 = arith.ori %31, %32 : vector<2x256xi1>
    %34 = arith.extui %33 : vector<2x256xi1> to vector<2x256xi8>
    %c0_8 = arith.constant 0 : index
    %c0_9 = arith.constant 0 : index
    %35 = vector.load %arg3[%c0_8, %c0_9] : memref<2x256xi8, #tpu.memory_space<vmem>>, vector<2x256xi8>
    tpu.vector_store %arg3[%c0_8, %c0_9], %34 {strides = array<i32>} : memref<2x256xi8, #tpu.memory_space<vmem>>, vector<2x256xi8>,
    return
  }
  func.func @transform_0(%arg0: i32) -> (i32, i32) {
    %c0_i32 = arith.constant 0 : i32
    %c0_i32_0 = arith.constant 0 : i32
    %c0_i32_1 = arith.constant 0 : i32
    return %c0_i32, %c0_i32_0 : i32, i32
  }
  func.func @transform_1(%arg0: i32) -> (i32, i32) {
    %c0_i32 = arith.constant 0 : i32
    %c0_i32_0 = arith.constant 0 : i32
    return %arg0, %c0_i32 : i32, i32
  }
  func.func @transform_2(%arg0: i32) -> (i32, i32) {
    %c0_i32 = arith.constant 0 : i32
    %c0_i32_0 = arith.constant 0 : i32
    return %arg0, %c0_i32 : i32, i32
  }
}

</mosaic_0001>

<llo_original>
// kernel: tpu_custom_call.1
$region0: #{tpu_custom_call.1}
  #allocation0 [shape = 'u32[]', space=smem, size = 0x4, offset = 0x4, fixed_abs, tag = 'smem constant byte address 0x4 - core index']
  #allocation1 [shape = 'u32[144,128]{1,0:T(1,128)}', space=vmem, size = 0x12000, scoped, tag = 'internal scratch']
  %s0 = inlined_call_operand.hbm [shape: f32[20,160], index: 0, kind: input, shape index: {}]
  %s1 = inlined_call_operand.vmem [shape: s32[20,160], index: 1, kind: output, shape index: {}]
  %s2 = sld [smem:[#allocation0]]
  $region41: #{tpu_custom_call.1} parent=0
    _
  %s4 = ssub.s32 1, %s2
  %s5 = scalar_select 0, %s4, %s2
  $region1: #{tpu_custom_call.1} parent=0
    #allocation2 [shape = 'u8[16384]{0}', space=vmem, size = 0x4000, scoped, tag = 'input window, operand 0']
    #allocation3 [shape = 's32[2]{0}', space=sflag, size = 0x8, scoped, tag = 'scoped memory for tpu_custom_call.1']
    %6 = vsyncpa [#allocation3], 0
    %s7 = scalar_lea.sflag [#allocation3], 1
    %8 = vsyncpa %s7, 0
    loop: start=0, step=1, limit=5
    $region2: #{tpu_custom_call.1} parent=1 // loop_pre_header
      _
    $region3: #{tpu_custom_call.1} parent=1 // loop_header
      %s10 = sphi 0, %s14
      %p11 = scmp.ge.s32.totalorder %s10, 5
      %s20 = sphi 0, %s22
      %s23 = sphi 0, %s20
      %s24 = sphi 0, %s23
      %s40 = sphi 0, %s24
      %s46 = sphi 0, %s48
      %s49 = sphi 0, %s46
      %s50 = sphi 0, %s49
      %s66 = sphi 0, %s50
    $region4: #{tpu_custom_call.1} parent=1 // loop_header_branch
      %13 = sbr.rel (%p11) target = $region8
    $region5: #{tpu_custom_call.1} parent=1 // loop_body
      %s15 = ssub.s32 %s10, 1
      %s16 = ssub.s32 %s10, 2
      %s17 = sadd.s32 %s10, 1
      %s18 = ssub.s32 %s10, %s17
      %p19 = scmp.eq.s32.totalorder %s18, 0
      %s21 = sadd.s32 %s20, 1
      %s22 = scalar_select %p19, %s20, %s21
      %p25 = pneg %p19
      %p26 = scmp.eq.s32.totalorder %s10, 2
      %p27 = por %p25, %p26
      %p28 = scmp.ne.s32.totalorder %s20, %s23
      %p29 = scmp.eq.s32.totalorder %s10, 0
      %p30 = por %p28, %p29
      %p31 = scmp.ne.s32.totalorder %s20, %s23
      %p32 = scmp.eq.s32.totalorder %s15, 2
      %p33 = por %p31, %p32
      %p34 = scmp.ne.s32.totalorder %s23, %s24
      %p35 = scmp.eq.s32.totalorder %s15, 0
      %p36 = por %p34, %p35
      %p37 = scmp.ne.s32.totalorder %s23, %s24
      %p38 = scmp.eq.s32.totalorder %s16, 2
      %p39 = por %p37, %p38
      %p41 = scmp.ne.s32.totalorder %s24, %s40
      %p42 = scmp.eq.s32.totalorder %s16, 0
      %p43 = por %p41, %p42
      %s44 = ssub.s32 %s10, %s17
      %p45 = scmp.eq.s32.totalorder %s44, 0
      %s47 = sadd.s32 %s46, 1
      %s48 = scalar_select %p45, %s46, %s47
      %p51 = pneg %p45
      %p52 = scmp.eq.s32.totalorder %s10, 2
      %p53 = por %p51, %p52
      %p54 = scmp.ne.s32.totalorder %s46, %s49
      %p55 = scmp.eq.s32.totalorder %s10, 0
      %p56 = por %p54, %p55
      %p57 = scmp.ne.s32.totalorder %s46, %s49
      %p58 = scmp.eq.s32.totalorder %s15, 2
      %p59 = por %p57, %p58
      %p60 = scmp.ne.s32.totalorder %s49, %s50
      %p61 = scmp.eq.s32.totalorder %s15, 0
      %p62 = por %p60, %p61
      %p63 = scmp.ne.s32.totalorder %s49, %s50
      %p64 = scmp.eq.s32.totalorder %s16, 2
      %p65 = por %p63, %p64
      %p67 = scmp.ne.s32.totalorder %s50, %s66
      %p68 = scmp.eq.s32.totalorder %s16, 0
      %p69 = por %p67, %p68
      %p70 = scmp.le.s32.totalorder 1, %s10
      %p71 = scmp.lt.s32.totalorder %s10, 4
      %p72 = pnand %p70, %p71
      %p73 = pneg %p72
      // Predicated region
      $region9: #{tpu_custom_call.1} parent=5 // pred_check
        _
      $region10: #{tpu_custom_call.1} parent=5 // pred_check_branch
        %75 = sbr.rel (%p72) target = $region12
      $region11: #{tpu_custom_call.1} parent=5 // pred_region
        %s76 = ssub.s32 %s10, 1
      $region12: #{tpu_custom_call.1} parent=5 // pred_fallthru
        _
      %p77 = scmp.lt.s32.totalorder %s10, 3
      // Predicated region
      $region13: #{tpu_custom_call.1} parent=5 // pred_check
        %p78 = pneg %p77
      $region14: #{tpu_custom_call.1} parent=5 // pred_check_branch
        %80 = sbr.rel (%p78) target = $region16
      $region15: #{tpu_custom_call.1} parent=5 // pred_region
        // Predicated region
        $region17: #{tpu_custom_call.1} parent=15 // pred_check
          %p81 = pneg %p30
        $region18: #{tpu_custom_call.1} parent=15 // pred_check_branch
          %83 = sbr.rel (%p81) target = $region20
        $region19: #{tpu_custom_call.1} parent=15 // pred_region
          %s84 = sand.u32 %s20, 1
          %s85 = scalar_lea.sflag [#allocation3], %s84
          %s86 = sand.u32 %s20, 1
          %s87 = smul.addr %s86, 16
          %s88 = scalar_lea.vmem [#allocation2], %s87
          %s90 = ssub.s32 256, 256
          %91 = vsyncadd %s85, %s90
          %s92 = smul.addr %s10, 2
          %s93 = smul.addr %s92, 128
          %s94 = scalar_lea.hbm %s0, %s93
          %s96 = sshll.u32 %s88, 4
          %s97 = int_to_ptr.vmem [resolvable:$true] %s96
          %99 = dma.hbm_to_vmem [thread:$0]  %s94, 256, %s97, %s85
        $region20: #{tpu_custom_call.1} parent=15 // pred_fallthru
          _
      $region16: #{tpu_custom_call.1} parent=5 // pred_fallthru
        _
      %p100 = scmp.le.s32.totalorder 1, %s10
      %p101 = scmp.lt.s32.totalorder %s10, 4
      %p102 = pnand %p100, %p101
      %p103 = pneg %p102
      // Predicated region
      $region21: #{tpu_custom_call.1} parent=5 // pred_check
        _
      $region22: #{tpu_custom_call.1} parent=5 // pred_check_branch
        %105 = sbr.rel (%p102) target = $region24
      $region23: #{tpu_custom_call.1} parent=5 // pred_region
        %s106 = ssub.s32 %s10, 1
        %s107 = sand.u32 %s23, 1
        %s108 = scalar_lea.sflag [#allocation3], %s107
        %s109 = sand.u32 %s23, 1
        %s110 = smul.addr %s109, 16
        %s111 = scalar_lea.vmem [#allocation2], %s110
        // Predicated region
        $region25: #{tpu_custom_call.1} parent=23 // pred_check
          %p112 = pneg %p36
        $region26: #{tpu_custom_call.1} parent=23 // pred_check_branch
          %114 = sbr.rel (%p112) target = $region28
        $region27: #{tpu_custom_call.1} parent=23 // pred_region
          %115 = dma.done %s108, 256
        $region28: #{tpu_custom_call.1} parent=23 // pred_fallthru
          _
        %s116 = sand.u32 %s23, 1
        %s117 = scalar_lea.sflag [#allocation3], %s116
        %s118 = sand.u32 %s23, 1
        %s119 = smul.addr %s118, 16
        %s120 = scalar_lea.vmem [#allocation2], %s119
        %p121 = pneg %p36
        %p122 = pneg %p33
        %p123 = pneg %p62
        %p124 = pneg %p59
        %p125 = scmp.lt.s32.totalorder %s15, 2
        %s126 = scalar_select %p125, %s15, 2
        %s127 = smul.addr %s126, 2
        %s128 = smul.addr %s127, 8
        %s129 = scalar_lea.vmem %s1, %s128
        %p130 = scmp.lt.s32.totalorder %s15, 2
        %s131 = scalar_select %p130, %s15, 2
        %s132 = smul.addr %s131, 2
        %s133 = smul.addr %s132, 8
        %s134 = scalar_lea.vmem %s1, %s133
        %v135 = vld [vmem:[%s111] sm:$0xff]
        %v136 = vld [vmem:[%s111 + $0x8] sm:$0xff]
        %vm137 = vcmp.gt.f32.partialorder %v135, 0.0
        %vm138 = vcmp.gt.f32.partialorder %v136, 0.0
        %v139 = vsel %vm137, 1, 0
        %v140 = vsel %vm138, 1, 0
        %141 = vst [vmem:[%s134] sm:$0xff] %v139
        %vm142 = vcmask 261120
        %143 = vst.msk [vmem:[%s134 + $0x8] sm:$0xff] %vm142, %v140
        %p144 = scmp.lt.s32.totalorder %s15, 2
        %s145 = scalar_select %p144, %s15, 2
        %s146 = smul.addr %s145, 2
        %s147 = smul.addr %s146, 8
        %s148 = scalar_lea.vmem %s1, %s147
        // Predicated region
        $region29: #{tpu_custom_call.1} parent=23 // pred_check
          %p149 = pneg %p59
        $region30: #{tpu_custom_call.1} parent=23 // pred_check_branch
          %151 = sbr.rel (%p149) target = $region32
        $region31: #{tpu_custom_call.1} parent=23 // pred_region
          _
        $region32: #{tpu_custom_call.1} parent=23 // pred_fallthru
          _
      $region24: #{tpu_custom_call.1} parent=5 // pred_fallthru
        _
      %p152 = scmp.le.s32.totalorder 2, %s10
      // Predicated region
      $region33: #{tpu_custom_call.1} parent=5 // pred_check
        %p153 = pneg %p152
      $region34: #{tpu_custom_call.1} parent=5 // pred_check_branch
        %155 = sbr.rel (%p153) target = $region36
      $region35: #{tpu_custom_call.1} parent=5 // pred_region
        %s156 = ssub.s32 %s10, 2
        // Predicated region
        $region37: #{tpu_custom_call.1} parent=35 // pred_check
          %p157 = pneg %p65
        $region38: #{tpu_custom_call.1} parent=35 // pred_check_branch
          %159 = sbr.rel (%p157) target = $region40
        $region39: #{tpu_custom_call.1} parent=35 // pred_region
          %p160 = scmp.lt.s32.totalorder %s16, 2
          %s161 = scalar_select %p160, %s16, 2
          %s162 = smul.addr %s161, 2
          %s163 = smul.addr %s162, 8
          %s164 = scalar_lea.vmem %s1, %s163
        $region40: #{tpu_custom_call.1} parent=35 // pred_fallthru
          _
      $region36: #{tpu_custom_call.1} parent=5 // pred_fallthru
        _
    $region6: #{tpu_custom_call.1} parent=1 // loop_footer
      %s14 = sadd.s32 1, %s10
    $region7: #{tpu_custom_call.1} parent=1 // loop_footer_branch
      %9 = sbr.rel target = $region3
    $region8: #{tpu_custom_call.1} parent=1 // loop_exit
      _
    %165 = vsyncpa [#allocation3], 1
    %s166 = scalar_lea.sflag [#allocation3], 1
    %167 = vsyncpa %s166, 1

// kernel: tpu_custom_call.1
$region0: #{tpu_custom_call.1}
  #allocation0 [shape = 'u32[]', space=smem, size = 0x4, offset = 0x4, fixed_abs, tag = 'smem constant byte address 0x4 - core index']
  #allocation1 [shape = 'u32[144,128]{1,0:T(1,128)}', space=vmem, size = 0x12000, scoped, tag = 'internal scratch']
  %s0 = inlined_call_operand.hbm [shape: s32[1,256], index: 0, kind: input, shape index: {}]
  %s1 = inlined_call_operand.hbm [shape: f32[2,256], index: 1, kind: input, shape index: {}]
  %s2 = inlined_call_operand.hbm [shape: u8[2,256], index: 2, kind: output, shape index: {}]
  %s3 = sld [smem:[#allocation0]]
  $region26: #{tpu_custom_call.1} parent=0
    _
  %s5 = ssub.s32 1, %s3
  %s6 = scalar_select 0, %s5, %s3
  $region1: #{tpu_custom_call.1} parent=0
    #allocation2 [shape = 'u8[1024]{0}', space=vmem, size = 0x400, scoped, tag = 'input window, operand 0, single buffered']
    #allocation3 [shape = 's32[1]{0}', space=sflag, size = 0x4, scoped, tag = 'scoped memory for tpu_custom_call.1']
    #allocation4 [shape = 's32[1]{0}', space=sflag, size = 0x4, scoped, tag = 'scoped memory for tpu_custom_call.1']
    #allocation5 [shape = 'u8[2048]{0}', space=vmem, size = 0x800, scoped, tag = 'input window, operand 1, single buffered']
    #allocation6 [shape = 's32[1]{0}', space=sflag, size = 0x4, scoped, tag = 'scoped memory for tpu_custom_call.1']
    #allocation7 [shape = 'u8[1024]{0}', space=vmem, size = 0x400, scoped, tag = 'output window, operand 0, single buffered']
    %7 = vsyncpa [#allocation3], 0
    %8 = vsyncpa [#allocation6], 0
    %9 = vsyncpa [#allocation4], 0
    // Predicated region
    $region2: #{tpu_custom_call.1} parent=1 // pred_check
      _
    $region3: #{tpu_custom_call.1} parent=1 // pred_check_branch
      %11 = sbr.rel (0) target = $region5
    $region4: #{tpu_custom_call.1} parent=1 // pred_region
      %s13 = ssub.s32 32, 32
      %14 = vsyncadd [#allocation3], %s13
      %s16 = sshll.u32 [#allocation2], 4
      %s17 = int_to_ptr.vmem [resolvable:$true] %s16
      %19 = dma.hbm_to_vmem [thread:$0]  %s0, 32, %s17, [#allocation3]
    $region5: #{tpu_custom_call.1} parent=1 // pred_fallthru
      _
    // Predicated region
    $region6: #{tpu_custom_call.1} parent=1 // pred_check
      _
    $region7: #{tpu_custom_call.1} parent=1 // pred_check_branch
      %21 = sbr.rel (0) target = $region9
    $region8: #{tpu_custom_call.1} parent=1 // pred_region
      %s23 = ssub.s32 64, 64
      %24 = vsyncadd [#allocation6], %s23
      %s26 = sshll.u32 [#allocation5], 4
      %s27 = int_to_ptr.vmem [resolvable:$true] %s26
      %29 = dma.hbm_to_vmem [thread:$0]  %s1, 64, %s27, [#allocation6]
    $region9: #{tpu_custom_call.1} parent=1 // pred_fallthru
      _
    // Predicated region
    $region10: #{tpu_custom_call.1} parent=1 // pred_check
      _
    $region11: #{tpu_custom_call.1} parent=1 // pred_check_branch
      %31 = sbr.rel (0) target = $region13
    $region12: #{tpu_custom_call.1} parent=1 // pred_region
      %32 = dma.done [#allocation3], 32
    $region13: #{tpu_custom_call.1} parent=1 // pred_fallthru
      _
    // Predicated region
    $region14: #{tpu_custom_call.1} parent=1 // pred_check
      _
    $region15: #{tpu_custom_call.1} parent=1 // pred_check_branch
      %34 = sbr.rel (0) target = $region17
    $region16: #{tpu_custom_call.1} parent=1 // pred_region
      %35 = dma.done [#allocation6], 64
    $region17: #{tpu_custom_call.1} parent=1 // pred_fallthru
      _
    %v38 = vld [vmem:[#allocation5] sm:$0xf]
    %v39 = vld [vmem:[#allocation2] sm:$0x3]
    %v40 = vlaneseq
    %v41 = vand.u32 %v40, 127
    %v42 = vadd.s32 %v41, 128
    %vm43 = vcmp.lt.s32.totalorder %v41, 16
    %vm44 = vcmp.lt.s32.totalorder %v42, 16
    %v47 = vunpack.c.l.s4 1983009808
    %v48 = vunpack.c.0.s8 %v47
    %v49 = vlaneseq
    %v50 = vshrl.u32 %v49, 7
    %v51 = vsub.s32 %v48, %v50
    %v52 = vrot.slane %v38, %v51
    %v53 = vcombine.high %v52, %v52
    %56 = vrot.lane.b32.xlu0 %v52, 16
    %v57 = vpop.permute.xlu0 %56
    %58 = vrot.lane.b32.xlu0 %v53, 16
    %v59 = vpop.permute.xlu0 %58
    %v60 = vsel %vm43, %v57, %v59
    %v61 = vsel %vm43, %v59, %v57
    %v62 = vsel %vm43, 1, 0
    %v63 = vsel %vm44, 1, 0
    %vm64 = vcmp.eq.s32.totalorder %v62, 1
    %vm65 = vcmp.eq.s32.totalorder %v63, 1
    %v66 = vsel %vm64, 0.0, %v61
    %v67 = vsel %vm65, 0.0, %v60
    %vm68 = vcmp.ge.s32.totalorder %v41, 240
    %vm69 = vcmp.ge.s32.totalorder %v42, 240
    %70 = vrot.lane.b32.xlu0 %v52, 112
    %v71 = vpop.permute.xlu0 %70
    %72 = vrot.lane.b32.xlu0 %v53, 112
    %v73 = vpop.permute.xlu0 %72
    %vm74 = vcmp.lt.s32.totalorder %v41, 112
    %v75 = vsel %vm74, %v71, %v73
    %v76 = vsel %vm74, %v73, %v71
    %v77 = vsel %vm68, 1, 0
    %v78 = vsel %vm69, 1, 0
    %vm79 = vcmp.eq.s32.totalorder %v77, 1
    %vm80 = vcmp.eq.s32.totalorder %v78, 1
    %v81 = vsel %vm79, 0.0, %v75
    %v82 = vsel %vm80, 0.0, %v76
    %vm83 = vcmp.eq.s32.totalorder %v39, 0
    %84 = vrot.lane.b32.xlu0 %v52, 1
    %v85 = vpop.permute.xlu0 %84
    %86 = vrot.lane.b32.xlu0 %v53, 1
    %v87 = vpop.permute.xlu0 %86
    %vm88 = vcmp.lt.s32.totalorder %v41, 1
    %v89 = vsel %vm88, %v85, %v87
    %v90 = vsel %vm88, %v87, %v85
    %v91 = vsel %vm83, 1, 0
    %v92 = vlaneseq
    %v93 = vshrl.u32 %v92, 7
    %v94 = vsub.s32 0, %v93
    %v95 = vrot.slane %v91, %v94
    %v96 = vlaneseq
    %v97 = vshrl.u32 %v96, 7
    %v98 = vsub.s32 1, %v97
    %v99 = vrot.slane %v91, %v98
    %vm100 = vcmp.eq.s32.totalorder %v95, 1
    %vm101 = vcmp.eq.s32.totalorder %v99, 1
    %v102 = vsel %vm100, 0.0, %v90
    %v103 = vsel %vm101, 0.0, %v89
    %vm104 = vcmp.eq.s32.totalorder %v39, 15
    %105 = vrot.lane.b32.xlu0 %v52, 127
    %v106 = vpop.permute.xlu0 %105
    %107 = vrot.lane.b32.xlu0 %v53, 127
    %v108 = vpop.permute.xlu0 %107
    %vm109 = vcmp.lt.s32.totalorder %v41, 127
    %v110 = vsel %vm109, %v106, %v108
    %v111 = vsel %vm109, %v108, %v106
    %v112 = vsel %vm104, 1, 0
    %v113 = vlaneseq
    %v114 = vshrl.u32 %v113, 7
    %v115 = vsub.s32 0, %v114
    %v116 = vrot.slane %v112, %v115
    %v117 = vlaneseq
    %v118 = vshrl.u32 %v117, 7
    %v119 = vsub.s32 1, %v118
    %v120 = vrot.slane %v112, %v119
    %vm121 = vcmp.eq.s32.totalorder %v116, 1
    %vm122 = vcmp.eq.s32.totalorder %v120, 1
    %v123 = vsel %vm121, 0.0, %v110
    %v124 = vsel %vm122, 0.0, %v111
    %vm125 = vcmp.ne.f32.partialorder %v66, %v81
    %vm126 = vcmp.ne.f32.partialorder %v67, %v82
    %vm127 = vcmp.ne.f32.partialorder %v102, %v123
    %vm128 = vcmp.ne.f32.partialorder %v103, %v124
    %vm129 = vmor %vm125, %vm127
    %vm130 = vmor %vm126, %vm128
    %vm131 = vmpackc.low %vm129, %vm129
    %vm132 = vmpackc.even %vm131, %vm131
    %vm133 = vmpackc.low %vm130, %vm130
    %vm134 = vmpackc.even %vm133, %vm133
    %v135 = vsel %vm132, 16843009, 0
    %v136 = vsel %vm134, 16843009, 0
    %v137 = vcombine.low %v135, %v136
    %v139 = vunpack.c.l.s4 1966171168
    %v140 = vunpack.c.0.s8 %v139
    %v141 = vlaneseq
    %v142 = vshrl.u32 %v141, 7
    %v143 = vsub.s32 %v140, %v142
    %v144 = vrot.slane %v137, %v143
    %v146 = vunpack.c.l.s4 1966171168
    %v147 = vunpack.c.0.s8 %v146
    %v148 = vlaneseq
    %v149 = vshrl.u32 %v148, 7
    %v150 = vsub.s32 %v147, %v149
    %v151 = vrot.slane %v144, %v150
    %vm152 = vcmask 1040384
    %vm153 = vsmask.f32 256
    %vm154 = vmand %vm152, %vm153
    %vm155 = vcmask 1041409
    %vm156 = vsmask.f32 1280
    %vm157 = vmand %vm155, %vm156
    %vm158 = vmor %vm157, %vm154
    %v159 = vld [vmem:[#allocation7] sm:$0x3]
    %v160 = vsel %vm158, %v151, %v159
    %161 = vst [vmem:[#allocation7] sm:$0x3] %v160
    // Predicated region
    $region18: #{tpu_custom_call.1} parent=1 // pred_check
      _
    $region19: #{tpu_custom_call.1} parent=1 // pred_check_branch
      %163 = sbr.rel (0) target = $region21
    $region20: #{tpu_custom_call.1} parent=1 // pred_region
      %s165 = ssub.s32 32, 32
      %166 = vsyncadd [#allocation4], %s165
      %s168 = sshll.u32 [#allocation7], 4
      %s169 = int_to_ptr.vmem [resolvable:$true] %s168
      %171 = dma.vmem_to_hbm [thread:$0]  %s169, 32, %s2, [#allocation4]
    $region21: #{tpu_custom_call.1} parent=1 // pred_fallthru
      _
    // Predicated region
    $region22: #{tpu_custom_call.1} parent=1 // pred_check
      _
    $region23: #{tpu_custom_call.1} parent=1 // pred_check_branch
      %173 = sbr.rel (0) target = $region25
    $region24: #{tpu_custom_call.1} parent=1 // pred_region
      %174 = dma.done [#allocation4], 32
    $region25: #{tpu_custom_call.1} parent=1 // pred_fallthru
      _
    %175 = vsyncpa [#allocation3], 1
    %176 = vsyncpa [#allocation6], 1
    %177 = vsyncpa [#allocation4], 1

</llo_original>
